<compile_context>
chip_gen: v6e
topology: v6e:2x2x1
jax: 0.10.0
libtpu: 0.0.40
codegen_flags: <defaults>
</compile_context>

<pallas_src>
import math
import functools

import jax
import jax.numpy as jnp
from jax.experimental import pallas as pl
from jax.experimental.pallas import tpu as pltpu


# ----------------------------------------------------------------------------
# Buffer construction (mirrors PositionalEncoding.__init__)
# ----------------------------------------------------------------------------
def make_positional_encoding_buffer(max_len, d_model, dtype=jnp.float32):
    pos = jnp.arange(max_len, dtype=jnp.float32)[:, None]                  # (L, 1)
    div = jnp.exp(jnp.arange(0, d_model, 2, dtype=jnp.float32)
                  * (-math.log(10000.0) / d_model))                        # (D/2,)
    ang = pos * div                                                        # (L, D/2)
    pe = jnp.zeros((max_len, d_model), dtype=jnp.float32)
    pe = pe.at[:, 0::2].set(jnp.sin(ang))
    pe = pe.at[:, 1::2].set(jnp.cos(ang))
    return pe.astype(dtype)                                                # (L, D)


# ----------------------------------------------------------------------------
# Kernels (operate on lane-dense 2D views)
# ----------------------------------------------------------------------------
def pe_add_kernel(x_ref, pe_ref, o_ref):
    # eval path: x + pe (dropout is identity at inference)
    # x_ref: (TB, TN), pe_ref: (1, TN) -> broadcast add
    o_ref[...] = x_ref[...] + pe_ref[...]


def pe_add_dropout_kernel(x_ref, pe_ref, bits_ref, o_ref, *, threshold, scale):
    # training path: inverted dropout applied to (x + pe)
    y = x_ref[...] + pe_ref[...]
    keep = bits_ref[...] < jnp.uint32(threshold)          # P(keep) = 1 - p
    o_ref[...] = (jnp.where(keep, jnp.float32(scale), jnp.float32(0.0))
                  * y).astype(o_ref.dtype)


# ----------------------------------------------------------------------------
# Tiling helpers
# ----------------------------------------------------------------------------
def _pick_row_tile(B):
    # Full batch if small / not sublane-aligned, otherwise 8-row (sublane) tiles.
    if B >= 8 and B % 8 == 0:
        return 8
    return B


def _pick_col_tile(N, cap=32768):
    # Largest multiple-of-128 divisor of N that is <= cap; keeps per-buffer
    # bytes small enough to fit default scoped VMEM on v5e/v6e/v7x while
    # staying lane-dense.  Falls back to the full extent when N is small or
    # not 128-aligned (full-extent blocks are always legal).
    if N <= cap or N % 128 != 0:
        return N
    t = cap - (cap % 128)
    while t >= 128:
        if N % t == 0:
            return t
        t -= 128
    return N


# ----------------------------------------------------------------------------
# Wrapper (forward pass)
# ----------------------------------------------------------------------------
def positional_encoding_forward(x, pe, *, dropout_p=0.1, training=False, seed=0):
    """x: (B, S, D);  pe: (max_len, D) buffer;  returns (B, S, D)."""
    B, S, D = x.shape
    N = S * D

    # Lane-dense 2D views; cast pe to the activation dtype once.
    x2 = x.reshape(B, N)
    pe2 = pe[:S].astype(x.dtype).reshape(1, N)

    TB = _pick_row_tile(B)
    TN = _pick_col_tile(N)
    grid = (N // TN, B // TB)        # column tiles OUTER -> pe block reused
                                     # across the inner batch-row axis.

    out_shape = jax.ShapeDtypeStruct((B, N), x.dtype)
    cparams = pltpu.CompilerParams(
        dimension_semantics=("parallel", "parallel"))

    if (not training) or dropout_p == 0.0:
        y2 = pl.pallas_call(
            pe_add_kernel,
            out_shape=out_shape,
            grid_spec=pltpu.PrefetchScalarGridSpec(
                num_scalar_prefetch=0,
                grid=grid,
                in_specs=[
                    pl.BlockSpec((TB, TN), lambda j, i: (i, j)),   # x
                    pl.BlockSpec((1, TN), lambda j, i: (0, j)),    # pe (resident)
                ],
                out_specs=pl.BlockSpec((TB, TN), lambda j, i: (i, j)),
            ),
            compiler_params=cparams,
        )(x2, pe2)
        return y2.reshape(B, S, D)

    p = float(dropout_p)
    threshold = min(int(round((1.0 - p) * (2 ** 32))), 2 ** 32 - 1)
    scale = 1.0 / (1.0 - p)

    # Host-side random bits (see TODO(synk) above); one uint32 per element.
    bits = jax.random.bits(jax.random.PRNGKey(seed), (B, N), dtype=jnp.uint32)

    kern = functools.partial(pe_add_dropout_kernel,
                             threshold=threshold, scale=scale)
    y2 = pl.pallas_call(
        kern,
        out_shape=out_shape,
        grid_spec=pltpu.PrefetchScalarGridSpec(
            num_scalar_prefetch=0,
            grid=grid,
            in_specs=[
                pl.BlockSpec((TB, TN), lambda j, i: (i, j)),   # x
                pl.BlockSpec((1, TN), lambda j, i: (0, j)),    # pe (resident)
                pl.BlockSpec((TB, TN), lambda j, i: (i, j)),   # random bits
            ],
            out_specs=pl.BlockSpec((TB, TN), lambda j, i: (i, j)),
        ),
        compiler_params=cparams,
    )(x2, pe2, bits)
    return y2.reshape(B, S, D)


# ----------------------------------------------------------------------------
# Demo
# ----------------------------------------------------------------------------
if __name__ == "__main__":
    # Small shapes consistent with the module: batch=2, seq=8, d_model=32.
    B, S, D = 2, 8, 32
    MAX_LEN = 64
    DROPOUT_P = 0.1

    key = jax.random.PRNGKey(0)
    x = jax.random.normal(key, (B, S, D), dtype=jnp.float32)

    pe = make_positional_encoding_buffer(MAX_LEN, D, dtype=jnp.float32)
    ref = x + pe[:S][None, :, :]

    # Eval-mode forward (dropout is identity) -- check against pure-JAX ref.
    y_eval = positional_encoding_forward(x, pe, dropout_p=DROPOUT_P,
                                         training=False)
    y_eval = jax.block_until_ready(y_eval)
    assert y_eval.shape == (B, S, D)
    assert jnp.allclose(y_eval, ref, atol=1e-6), "eval-path mismatch"

    # Training-mode forward (inverted dropout inside the kernel).
    y_train = positional_encoding_forward(x, pe, dropout_p=DROPOUT_P,
                                          training=True, seed=1234)
    y_train = jax.block_until_ready(y_train)
    assert y_train.shape == (B, S, D)
    # Every output element is either 0 (dropped) or (x+pe)/(1-p) (kept).
    expected_kept = ref / (1.0 - DROPOUT_P)
    ok = jnp.all((y_train == 0.0)
                 | (jnp.abs(y_train - expected_kept) < 1e-5))
    assert bool(ok), "training-path mismatch"

    print("KERNEL_OK")
</pallas_src>

<mosaic_0001>
module attributes {stable_mosaic.version = 11 : i64} {
  func.func @pe_add_kernel(%arg0: i32, %arg1: i32, %arg2: memref<2x256xf32, #tpu.memory_space<vmem>>, %arg3: memref<1x256xf32, #tpu.memory_space<vmem>>, %arg4: memref<2x256xf32, #tpu.memory_space<vmem>>) attributes {dimension_semantics = [#tpu.dimension_semantics<parallel>, #tpu.dimension_semantics<parallel>], iteration_bounds = array<i64: 1, 1>, scalar_prefetch = 0 : i64, scratch_operands = 0 : i64, tpu.core_type = #tpu.core_type<tc>, window_params = [{transform_indices = @transform_0, window_bounds = array<i64: 2, 256>}, {transform_indices = @transform_1, window_bounds = array<i64: 1, 256>}, {transform_indices = @transform_2, window_bounds = array<i64: 2, 256>}]} {
    %c0 = arith.constant 0 : index
    %c0_0 = arith.constant 0 : index
    %0 = vector.load %arg2[%c0, %c0_0] : memref<2x256xf32, #tpu.memory_space<vmem>>, vector<2x256xf32>
    %c0_1 = arith.constant 0 : index
    %c0_2 = arith.constant 0 : index
    %1 = vector.load %arg3[%c0_1, %c0_2] : memref<1x256xf32, #tpu.memory_space<vmem>>, vector<1x256xf32>
    %2 = vector.broadcast %1 : vector<1x256xf32> to vector<2x256xf32>
    %3 = arith.addf %0, %2 : vector<2x256xf32>
    %c0_3 = arith.constant 0 : index
    %c0_4 = arith.constant 0 : index
    %4 = vector.load %arg4[%c0_3, %c0_4] : memref<2x256xf32, #tpu.memory_space<vmem>>, vector<2x256xf32>
    tpu.vector_store %arg4[%c0_3, %c0_4], %3 {strides = array<i32>} : memref<2x256xf32, #tpu.memory_space<vmem>>, vector<2x256xf32>,
    return
  }
  func.func @transform_0(%arg0: i32, %arg1: i32) -> (i32, i32) {
    %c0_i32 = arith.constant 0 : i32
    return %arg1, %arg0 : i32, i32
  }
  func.func @transform_1(%arg0: i32, %arg1: i32) -> (i32, i32) {
    %c0_i32 = arith.constant 0 : i32
    %c0_i32_0 = arith.constant 0 : i32
    return %c0_i32, %arg0 : i32, i32
  }
  func.func @transform_2(%arg0: i32, %arg1: i32) -> (i32, i32) {
    %c0_i32 = arith.constant 0 : i32
    return %arg1, %arg0 : i32, i32
  }
}

</mosaic_0001>

<llo_original>
// kernel: tpu_custom_call.1
$region0: #{tpu_custom_call.1}
  #allocation0 [shape = 'u32[]', space=smem, size = 0x4, offset = 0x4, fixed_abs, tag = 'smem constant byte address 0x4 - core index']
  #allocation1 [shape = 'u32[144,128]{1,0:T(1,128)}', space=vmem, size = 0x12000, scoped, tag = 'internal scratch']
  %s0 = inlined_call_operand.hbm [shape: f32[2,256], index: 0, kind: input, shape index: {}]
  %s1 = inlined_call_operand.hbm [shape: f32[1,256], index: 1, kind: input, shape index: {}]
  %s2 = inlined_call_operand.hbm [shape: f32[2,256], index: 2, kind: output, shape index: {}]
  %s3 = sld [smem:[#allocation0]]
  $region26: #{tpu_custom_call.1} parent=0
    _
  %s5 = ssub.s32 1, %s3
  %s6 = scalar_select 0, %s5, %s3
  $region1: #{tpu_custom_call.1} parent=0
    #allocation2 [shape = 'u8[2048]{0}', space=vmem, size = 0x800, scoped, tag = 'input window, operand 0, single buffered']
    #allocation3 [shape = 's32[1]{0}', space=sflag, size = 0x4, scoped, tag = 'scoped memory for tpu_custom_call.1']
    #allocation4 [shape = 's32[1]{0}', space=sflag, size = 0x4, scoped, tag = 'scoped memory for tpu_custom_call.1']
    #allocation5 [shape = 'u8[1024]{0}', space=vmem, size = 0x400, scoped, tag = 'input window, operand 1, single buffered']
    #allocation6 [shape = 's32[1]{0}', space=sflag, size = 0x4, scoped, tag = 'scoped memory for tpu_custom_call.1']
    #allocation7 [shape = 'u8[2048]{0}', space=vmem, size = 0x800, scoped, tag = 'output window, operand 0, single buffered']
    %7 = vsyncpa [#allocation3], 0
    %8 = vsyncpa [#allocation6], 0
    %9 = vsyncpa [#allocation4], 0
    // Predicated region
    $region2: #{tpu_custom_call.1} parent=1 // pred_check
      _
    $region3: #{tpu_custom_call.1} parent=1 // pred_check_branch
      %11 = sbr.rel (0) target = $region5
    $region4: #{tpu_custom_call.1} parent=1 // pred_region
      %s13 = ssub.s32 64, 64
      %14 = vsyncadd [#allocation3], %s13
      %s16 = sshll.u32 [#allocation2], 4
      %s17 = int_to_ptr.vmem [resolvable:$true] %s16
      %19 = dma.hbm_to_vmem [thread:$0]  %s0, 64, %s17, [#allocation3]
    $region5: #{tpu_custom_call.1} parent=1 // pred_fallthru
      _
    // Predicated region
    $region6: #{tpu_custom_call.1} parent=1 // pred_check
      _
    $region7: #{tpu_custom_call.1} parent=1 // pred_check_branch
      %21 = sbr.rel (0) target = $region9
    $region8: #{tpu_custom_call.1} parent=1 // pred_region
      %s23 = ssub.s32 32, 32
      %24 = vsyncadd [#allocation6], %s23
      %s26 = sshll.u32 [#allocation5], 4
      %s27 = int_to_ptr.vmem [resolvable:$true] %s26
      %29 = dma.hbm_to_vmem [thread:$0]  %s1, 32, %s27, [#allocation6]
    $region9: #{tpu_custom_call.1} parent=1 // pred_fallthru
      _
    // Predicated region
    $region10: #{tpu_custom_call.1} parent=1 // pred_check
      _
    $region11: #{tpu_custom_call.1} parent=1 // pred_check_branch
      %31 = sbr.rel (0) target = $region13
    $region12: #{tpu_custom_call.1} parent=1 // pred_region
      %32 = dma.done [#allocation3], 64
    $region13: #{tpu_custom_call.1} parent=1 // pred_fallthru
      _
    // Predicated region
    $region14: #{tpu_custom_call.1} parent=1 // pred_check
      _
    $region15: #{tpu_custom_call.1} parent=1 // pred_check_branch
      %34 = sbr.rel (0) target = $region17
    $region16: #{tpu_custom_call.1} parent=1 // pred_region
      %35 = dma.done [#allocation6], 32
    $region17: #{tpu_custom_call.1} parent=1 // pred_fallthru
      _
    %v36 = vld [vmem:[#allocation2] sm:$0xf]
    %v37 = vld [vmem:[#allocation5] sm:$0x3]
    %v39 = vlaneseq
    %v40 = vshrl.u32 %v39, 7
    %v41 = vsub.s32 0, %v40
    %v42 = vrot.slane %v37, %v41
    %v43 = vlaneseq
    %v44 = vshrl.u32 %v43, 7
    %v45 = vsub.s32 1, %v44
    %v46 = vrot.slane %v37, %v45
    %v47 = vcombine.low %v42, %v46
    %v49 = vunpack.c.l.s4 1983009808
    %v50 = vunpack.c.0.s8 %v49
    %v51 = vlaneseq
    %v52 = vshrl.u32 %v51, 7
    %v53 = vsub.s32 %v50, %v52
    %v54 = vrot.slane %v47, %v53
    %v56 = vadd.f32 %v36, %v54
    %57 = vst [vmem:[#allocation7] sm:$0xf] %v56
    // Predicated region
    $region18: #{tpu_custom_call.1} parent=1 // pred_check
      _
    $region19: #{tpu_custom_call.1} parent=1 // pred_check_branch
      %59 = sbr.rel (0) target = $region21
    $region20: #{tpu_custom_call.1} parent=1 // pred_region
      %s61 = ssub.s32 64, 64
      %62 = vsyncadd [#allocation4], %s61
      %s64 = sshll.u32 [#allocation7], 4
      %s65 = int_to_ptr.vmem [resolvable:$true] %s64
      %67 = dma.vmem_to_hbm [thread:$0]  %s65, 64, %s2, [#allocation4]
    $region21: #{tpu_custom_call.1} parent=1 // pred_fallthru
      _
    // Predicated region
    $region22: #{tpu_custom_call.1} parent=1 // pred_check
      _
    $region23: #{tpu_custom_call.1} parent=1 // pred_check_branch
      %69 = sbr.rel (0) target = $region25
    $region24: #{tpu_custom_call.1} parent=1 // pred_region
      %70 = dma.done [#allocation4], 64
    $region25: #{tpu_custom_call.1} parent=1 // pred_fallthru
      _
    %71 = vsyncpa [#allocation3], 1
    %72 = vsyncpa [#allocation6], 1
    %73 = vsyncpa [#allocation4], 1

</llo_original>
